<compile_context>
chip_gen: v5e
topology: v5e:2x2
jax: 0.10.0
libtpu: 0.0.40
codegen_flags: <defaults>
</compile_context>

<pallas_src>
import jax
import jax.numpy as jnp
from jax.experimental import pallas as pl
from jax.experimental.pallas import tpu as pltpu


# ---------------------------------------------------------------------------
# Kernels
# ---------------------------------------------------------------------------
def _softmax_rowwise_kernel(x_ref, o_ref):
    # x_ref, o_ref: (TB, C) VMEM tiles; softmax over the lane (class) axis.
    # TODO(synk): optionally keep bf16 math on v6e/v7x to halve vreg pressure.
    x = x_ref[...].astype(jnp.float32)
    m = jnp.max(x, axis=1, keepdims=True)
    e = jnp.exp(x - m)
    s = jnp.sum(e, axis=1, keepdims=True)
    # Exact division: rows sum to 1 within f32 rounding (approx vrcp does not).
    o_ref[...] = (e / s).astype(o_ref.dtype)


def _softmax_stats_kernel(x_ref, m_ref, l_ref):
    """Pass 1 of the online softmax: running max / running sum per row.

    Grid is (batch_blocks, class_blocks); m/l output blocks keep the same block
    index across the class axis, so they stay resident in VMEM (accumulators).
    """
    c = pl.program_id(1)

    @pl.when(c == 0)
    def _init():
        m_ref[...] = jnp.full(m_ref.shape, -jnp.inf, dtype=m_ref.dtype)
        l_ref[...] = jnp.zeros(l_ref.shape, dtype=l_ref.dtype)

    x = x_ref[...].astype(jnp.float32)
    m_prev = m_ref[...]
    m_new = jnp.maximum(m_prev, jnp.max(x, axis=1, keepdims=True))
    l_ref[...] = (l_ref[...] * jnp.exp(m_prev - m_new)
                  + jnp.sum(jnp.exp(x - m_new), axis=1, keepdims=True))
    m_ref[...] = m_new


def _softmax_normalize_kernel(x_ref, m_ref, l_ref, o_ref):
    """Pass 2: pure elementwise normalize, lane-dense output stores."""
    x = x_ref[...].astype(jnp.float32)
    o_ref[...] = (jnp.exp(x - m_ref[...]) / l_ref[...]).astype(o_ref.dtype)


# ---------------------------------------------------------------------------
# Generation-aware VMEM budget & tiling heuristics
# ---------------------------------------------------------------------------
def _round_up(n: int, m: int) -> int:
    return pl.cdiv(n, m) * m


def _vmem_physical_bytes() -> int:
    """Physical VMEM of the attached TPU (128 MiB v5e/v6e, 64 MiB v7x)."""
    try:
        cap = getattr(pltpu.get_tpu_info(), "vmem_capacity_bytes", None)
        if cap:
            return int(cap)
    except Exception:
        pass
    return 64 * 1024 * 1024  # conservative (v7x-sized) fallback


def _vmem_tile_budget_bytes() -> int:
    # Budget for the double-buffered in/out tiles + f32 temps (~65% physical).
    return int(_vmem_physical_bytes() * 0.65)


def _vmem_limit_bytes() -> int:
    # Explicit scoped-VMEM limit passed to Mosaic (leave ~15% headroom).
    return int(_vmem_physical_bytes() * 0.85)


def _compiler_params(dims):
    return pltpu.CompilerParams(dimension_semantics=dims,
                                vmem_limit_bytes=_vmem_limit_bytes())


def _sublane_align(dtype) -> int:
    # Sublane packing: 8 rows for 4-byte dtypes, 16 for bf16, 32 for 1-byte.
    return max(8, 32 // jnp.dtype(dtype).itemsize)


def _bytes_per_row(c: int, itemsize: int) -> int:
    # 2x double-buffered input + 2x double-buffered output tiles (itemsize each)
    # plus ~2 f32-sized fused intermediates (upcast x / exp result).
    return c * (4 * itemsize + 8)


def _pick_tb(b: int, c: int, dtype, *, min_steps: int = 2,
             plateau_rows: int = 512) -> int:
    """Batch-tile height: largest sublane-aligned tile that fits the budget,
    split into >=2 grid steps (v7x megacore) only when each piece stays at or
    above the ~512-row memory-roofline plateau."""
    align = _sublane_align(dtype)
    itemsize = jnp.dtype(dtype).itemsize
    budget = _vmem_tile_budget_bytes()
    cap = max(align, (budget // _bytes_per_row(c, itemsize)) // align * align)
    b_aligned = _round_up(b, align)
    tb = min(cap, b_aligned)
    nsteps = pl.cdiv(b_aligned, tb)
    if nsteps < min_steps:
        cand = _round_up(pl.cdiv(b_aligned, min_steps), align)
        if cand >= min(plateau_rows, tb):
            nsteps = min_steps
    # Even out the tiles across nsteps so batch padding stays tiny.
    tb = max(align, _round_up(pl.cdiv(b_aligned, nsteps), align))
    return tb


def _pad_input(x: jax.Array, b_pad: int, c_pad: int) -> jax.Array:
    B, C = x.shape
    if c_pad > C:
        # -inf padding on the class axis: exp(-inf - m) == 0, sum unchanged.
        x = jnp.pad(x, ((0, 0), (0, c_pad - C)), constant_values=float("-inf"))
    if b_pad > B:
        # Zero rows on the batch axis: finite softmax, sliced away afterwards.
        x = jnp.pad(x, ((0, b_pad - B), (0, 0)))
    return x


# ---------------------------------------------------------------------------
# Wrapper
# ---------------------------------------------------------------------------
def softmax_dim1(x: jax.Array, *, tb: int | None = None,
                 tc: int | None = None) -> jax.Array:
    """Softmax over axis 1 of a (B, C) array (PyTorch nn.Softmax(dim=1))."""
    assert x.ndim == 2, "kernel expects (B, C) logits; softmax over axis 1"
    B, C = x.shape
    dtype = x.dtype
    itemsize = jnp.dtype(dtype).itemsize
    align = _sublane_align(dtype)
    budget = _vmem_tile_budget_bytes()

    C_pad = _round_up(C, 128)  # lane-dense output stores

    # Two-pass only if even a minimal aligned batch tile of the full (padded)
    # row does not fit the budget, or the caller explicitly asks for a class
    # tile.  The two-pass path costs 1.5x HBM traffic, so stay single-pass
    # whenever the row fits.
    use_two_pass = tc is not None or (
        align * _bytes_per_row(C_pad, itemsize) > budget)

    if not use_two_pass:
        if tb is None:
            tb = _pick_tb(B, C_pad, dtype)
        else:
            tb = max(align, _round_up(tb, align))
        B_pad = _round_up(B, tb)

        xp = _pad_input(x, B_pad, C_pad)
        y = pl.pallas_call(
            _softmax_rowwise_kernel,
            out_shape=jax.ShapeDtypeStruct((B_pad, C_pad), dtype),
            grid_spec=pltpu.PrefetchScalarGridSpec(
                num_scalar_prefetch=0,
                grid=(B_pad // tb,),
                in_specs=[pl.BlockSpec((tb, C_pad), lambda i: (i, 0))],
                out_specs=pl.BlockSpec((tb, C_pad), lambda i: (i, 0)),
            ),
            compiler_params=_compiler_params(("parallel",)),
        )(xp)
        if B_pad != B or C_pad != C:
            y = y[:B, :C]
        return y

    # ---------------- two-pass (online softmax) path ----------------
    if tc is None:
        cap_tc = max(128, (budget // (align * (4 * itemsize + 8))) // 128 * 128)
        tc = min(_round_up(C, 128), cap_tc)
    else:
        tc = max(128, _round_up(tc, 128))
    C_pad = _round_up(C, tc)

    if tb is None:
        tb = _pick_tb(B, tc, dtype)
    else:
        tb = max(align, _round_up(tb, align))
    B_pad = _round_up(B, tb)

    nb = B_pad // tb
    nc = C_pad // tc
    xp = _pad_input(x, B_pad, C_pad)

    # Pass 1: per-row running max / running sum (tiny f32 stats outputs).
    m_stat, l_stat = pl.pallas_call(
        _softmax_stats_kernel,
        out_shape=(jax.ShapeDtypeStruct((B_pad, 1), jnp.float32),
                   jax.ShapeDtypeStruct((B_pad, 1), jnp.float32)),
        grid_spec=pltpu.PrefetchScalarGridSpec(
            num_scalar_prefetch=0,
            grid=(nb, nc),
            in_specs=[pl.BlockSpec((tb, tc), lambda i, c: (i, c))],
            out_specs=[pl.BlockSpec((tb, 1), lambda i, c: (i, 0)),
                       pl.BlockSpec((tb, 1), lambda i, c: (i, 0))],
        ),
        compiler_params=_compiler_params(("parallel", "arbitrary")),
    )(xp)

    # Pass 2: lane-dense elementwise normalize.
    y = pl.pallas_call(
        _softmax_normalize_kernel,
        out_shape=jax.ShapeDtypeStruct((B_pad, C_pad), dtype),
        grid_spec=pltpu.PrefetchScalarGridSpec(
            num_scalar_prefetch=0,
            grid=(nb, nc),
            in_specs=[pl.BlockSpec((tb, tc), lambda i, c: (i, c)),
                      pl.BlockSpec((tb, 1), lambda i, c: (i, 0)),
                      pl.BlockSpec((tb, 1), lambda i, c: (i, 0))],
            out_specs=pl.BlockSpec((tb, tc), lambda i, c: (i, c)),
        ),
        compiler_params=_compiler_params(("parallel", "parallel")),
    )(xp, m_stat, l_stat)

    if B_pad != B or C_pad != C:
        y = y[:B, :C]
    return y


if __name__ == "__main__":
    key = jax.random.PRNGKey(0)
    k0, k1 = jax.random.split(key)

    # Classifier-head sized logits consistent with GradCNN's SoftMax: (B=8, C=32).
    x = jax.random.normal(k0, (8, 32), dtype=jnp.float32)
    y = jax.block_until_ready(softmax_dim1(x))
    y_ref = jax.nn.softmax(x, axis=1)
    assert y.shape == x.shape and y.dtype == x.dtype
    assert jnp.allclose(y, y_ref, atol=1e-4, rtol=1e-4)
    assert jnp.allclose(jnp.sum(y, axis=1), 1.0, atol=1e-4)

    # Batch-tiled single-pass path (grid > 1) at a small, lane-aligned shape.
    x2 = jax.random.normal(k1, (64, 256), dtype=jnp.float32)
    y2 = jax.block_until_ready(softmax_dim1(x2, tb=8))
    assert jnp.allclose(y2, jax.nn.softmax(x2, axis=1), atol=1e-4, rtol=1e-4)

    # Two-pass (online-softmax) wide-C fallback, exercised at a small shape.
    y3 = jax.block_until_ready(softmax_dim1(x2, tc=128))
    assert jnp.allclose(y3, jax.nn.softmax(x2, axis=1), atol=1e-4, rtol=1e-4)

    # Unaligned batch and non-128-multiple class count (padding path).
    x3 = jax.random.normal(k0, (5, 200), dtype=jnp.float32)
    y4 = jax.block_until_ready(softmax_dim1(x3))
    assert jnp.allclose(y4, jax.nn.softmax(x3, axis=1), atol=1e-4, rtol=1e-4)

    print("KERNEL_OK")
</pallas_src>

<mosaic_0001>
module attributes {stable_mosaic.version = 11 : i64} {
  func.func @_softmax_rowwise_kernel(%arg0: i32, %arg1: memref<8x128xf32, #tpu.memory_space<vmem>>, %arg2: memref<8x128xf32, #tpu.memory_space<vmem>>) attributes {dimension_semantics = [#tpu.dimension_semantics<parallel>], iteration_bounds = array<i64: 1>, scalar_prefetch = 0 : i64, scratch_operands = 0 : i64, tpu.core_type = #tpu.core_type<tc>, window_params = [{transform_indices = @transform_0, window_bounds = array<i64: 8, 128>}, {transform_indices = @transform_1, window_bounds = array<i64: 8, 128>}]} {
    %c0 = arith.constant 0 : index
    %c0_0 = arith.constant 0 : index
    %0 = vector.load %arg1[%c0, %c0_0] : memref<8x128xf32, #tpu.memory_space<vmem>>, vector<8x128xf32>
    %cst = arith.constant dense<0xFF800000> : vector<8xf32>
    %1 = vector.multi_reduction <maximumf>, %0, %cst [1] : vector<8x128xf32> to vector<8xf32>
    %2 = vector.shape_cast %1 : vector<8xf32> to vector<8x1xf32>
    %3 = vector.broadcast %2 : vector<8x1xf32> to vector<8x128xf32>
    %4 = arith.subf %0, %3 : vector<8x128xf32>
    %5 = math.exp %4 : vector<8x128xf32>
    %cst_1 = arith.constant dense<0.000000e+00> : vector<8xf32>
    %6 = vector.multi_reduction <add>, %5, %cst_1 [1] : vector<8x128xf32> to vector<8xf32>
    %7 = vector.shape_cast %6 : vector<8xf32> to vector<8x1xf32>
    %8 = vector.broadcast %7 : vector<8x1xf32> to vector<8x128xf32>
    %9 = arith.divf %5, %8 : vector<8x128xf32>
    %c0_2 = arith.constant 0 : index
    %c0_3 = arith.constant 0 : index
    %10 = vector.load %arg2[%c0_2, %c0_3] : memref<8x128xf32, #tpu.memory_space<vmem>>, vector<8x128xf32>
    tpu.vector_store %arg2[%c0_2, %c0_3], %9 {strides = array<i32>} : memref<8x128xf32, #tpu.memory_space<vmem>>, vector<8x128xf32>,
    return
  }
  func.func @transform_0(%arg0: i32) -> (i32, i32) {
    %c0_i32 = arith.constant 0 : i32
    %c0_i32_0 = arith.constant 0 : i32
    return %arg0, %c0_i32 : i32, i32
  }
  func.func @transform_1(%arg0: i32) -> (i32, i32) {
    %c0_i32 = arith.constant 0 : i32
    %c0_i32_0 = arith.constant 0 : i32
    return %arg0, %c0_i32 : i32, i32
  }
}

</mosaic_0001>

<llo_original>
// kernel: tpu_custom_call.1
$region0: #{tpu_custom_call.1}
  #allocation0 [shape = 'u32[]', space=smem, size = 0x4, offset = 0x4, fixed_abs, tag = 'smem constant byte address 0x4 - core index']
  #allocation1 [shape = 'u32[72,128]{1,0:T(1,128)}', space=vmem, size = 0x9000, scoped, tag = 'internal scratch']
  %s0 = inlined_call_operand.hbm [shape: f32[8,128], index: 0, kind: input, shape index: {}]
  %s1 = inlined_call_operand.hbm [shape: f32[8,128], index: 1, kind: output, shape index: {}]
  %s2 = sld [smem:[#allocation0]]
  $region18: #{tpu_custom_call.1} parent=0
    _
  %s4 = ssub.s32 1, %s2
  %s5 = scalar_select 0, %s4, %s2
  $region1: #{tpu_custom_call.1} parent=0
    #allocation2 [shape = 'u8[4096]{0}', space=vmem, size = 0x1000, scoped, tag = 'input window, operand 0, single buffered']
    #allocation3 [shape = 's32[1]{0}', space=sflag, size = 0x4, scoped, tag = 'scoped memory for tpu_custom_call.1']
    #allocation4 [shape = 's32[1]{0}', space=sflag, size = 0x4, scoped, tag = 'scoped memory for tpu_custom_call.1']
    #allocation5 [shape = 'u8[4096]{0}', space=vmem, size = 0x1000, scoped, tag = 'output window, operand 0, single buffered']
    %6 = vsyncpa [#allocation3], 0
    %7 = vsyncpa [#allocation4], 0
    // Predicated region
    $region2: #{tpu_custom_call.1} parent=1 // pred_check
      _
    $region3: #{tpu_custom_call.1} parent=1 // pred_check_branch
      %9 = sbr.rel (0) target = $region5
    $region4: #{tpu_custom_call.1} parent=1 // pred_region
      %11 = vsyncadd [#allocation3], 0
      %s13 = sshll.u32 %s0, 4
      %s14 = int_to_ptr.hbm [resolvable:$true] %s13
      %s15 = sshll.u32 [#allocation2], 4
      %s16 = int_to_ptr.vmem [resolvable:$true] %s15
      %18 = dma.hbm_to_vmem [thread:$0]  %s14, 128, %s16, [#allocation3]
    $region5: #{tpu_custom_call.1} parent=1 // pred_fallthru
      _
    // Predicated region
    $region6: #{tpu_custom_call.1} parent=1 // pred_check
      _
    $region7: #{tpu_custom_call.1} parent=1 // pred_check_branch
      %20 = sbr.rel (0) target = $region9
    $region8: #{tpu_custom_call.1} parent=1 // pred_region
      %22 = dma.done [#allocation3], 128
    $region9: #{tpu_custom_call.1} parent=1 // pred_fallthru
      _
    %v23 = vld [vmem:[#allocation2] sm:$0xff]
    %24 = vmax.xlane.f32.xlu0 %v23
    %v25 = vpop.xlane.xlu0 %24
    %v26 = vsub.f32 %v23, %v25
    %v27 = vmul.f32 %v26, 1.442695
    %v28 = vpow.pop %v27
    %29 = vadd.xlane.f32.xlu0 %v28
    %v30 = vpop.xlane.xlu0 %29
    %v31 = vrcp.pop %v30
    %v32 = vmul.f32 %v30, %v31
    %v33 = vsub.f32 1.0, %v32
    %v34 = vmul.f32 %v31, %v33
    %v35 = vadd.f32 %v31, %v34
    %vm36 = vweird.f32 %v30
    %vm37 = vweird.f32 %v31
    %vm38 = vmor %vm36, %vm37
    %v39 = vsel %vm38, %v31, %v35
    %v40 = vand.u32 2147483647, %v30
    %vm41 = vcmp.eq.f32.partialorder %v40, 8.507059e+37
    %v42 = vand.u32 %v30, 2147483648
    %v43 = vor.u32 1.1754944e-38, %v42
    %v44 = vsel %vm41, %v43, %v39
    %v45 = vmul.f32 %v28, %v44
    %46 = vst [vmem:[#allocation5] sm:$0xff] %v45
    // Predicated region
    $region10: #{tpu_custom_call.1} parent=1 // pred_check
      _
    $region11: #{tpu_custom_call.1} parent=1 // pred_check_branch
      %48 = sbr.rel (0) target = $region13
    $region12: #{tpu_custom_call.1} parent=1 // pred_region
      %50 = vsyncadd [#allocation4], 0
      %s52 = sshll.u32 [#allocation5], 4
      %s53 = int_to_ptr.vmem [resolvable:$true] %s52
      %s54 = sshll.u32 %s1, 4
      %s55 = int_to_ptr.hbm [resolvable:$true] %s54
      %57 = dma.vmem_to_hbm [thread:$0]  %s53, 128, %s55, [#allocation4]
    $region13: #{tpu_custom_call.1} parent=1 // pred_fallthru
      _
    // Predicated region
    $region14: #{tpu_custom_call.1} parent=1 // pred_check
      _
    $region15: #{tpu_custom_call.1} parent=1 // pred_check_branch
      %59 = sbr.rel (0) target = $region17
    $region16: #{tpu_custom_call.1} parent=1 // pred_region
      %61 = dma.done [#allocation4], 128
    $region17: #{tpu_custom_call.1} parent=1 // pred_fallthru
      _
    %62 = vsyncpa [#allocation3], 1
    %63 = vsyncpa [#allocation4], 1

</llo_original>
